<compile_context>
chip_gen: v7x
topology: tpu7x:2x2x1
jax: 0.10.0
libtpu: 0.0.40
codegen_flags: <defaults>
</compile_context>

<pallas_src>
import functools

import numpy as np
import jax
import jax.numpy as jnp
from jax import lax
from jax.experimental import pallas as pl
from jax.experimental.pallas import tpu as pltpu


def _cdiv(a, b):
    return (a + b - 1) // b


def _proto_kernel(protos_ref, p2_ref, tgt_ref, query_ref, out_ref):
    """One query tile.

    protos_ref: (C, D)  matmul dtype, resident across the grid (constant index_map).
    p2_ref:     (C, 1)  f32 ||p_c||^2, resident.
    tgt_ref:    (1, TQ) int32 true class per query in this tile (-1 for padding rows).
    query_ref:  (TQ, D) matmul dtype query tile.
    out_ref:    (1, 128) f32: lane 0 = sum of -log p(true class), lane 1 = #correct.
    """
    C = protos_ref.shape[0]
    q = query_ref[...]                                         # (TQ, D)
    TQ = q.shape[0]

    # logits[c, q] = -||q - p_c||^2 + ||q||^2 = 2<q, p_c> - ||p_c||^2
    # (the per-query ||q||^2 row-constant cancels in log_softmax / argmax).
    qp = lax.dot_general(protos_ref[...], q,
                         dimension_numbers=(((1,), (1,)), ((), ())),
                         preferred_element_type=jnp.float32)   # (C, TQ) f32 accumulate
    logits = 2.0 * qp - p2_ref[...]                            # (C, TQ), lane-dense

    # per-query log_softmax over classes (axis 0)
    m = jnp.max(logits, axis=0, keepdims=True)                 # (1, TQ)
    sh = logits - m                                            # <= 0, == 0 at the max
    lse = jnp.log(jnp.sum(jnp.exp(sh), axis=0, keepdims=True))
    log_p = sh - lse                                           # (C, TQ)

    tgt = tgt_ref[...]                                         # (1, TQ) int32, -1 = pad
    cls = lax.broadcasted_iota(jnp.int32, (C, TQ), 0)          # (C, TQ)

    # loss: padding rows have tgt == -1 and match no class row -> contribute 0.
    picked = jnp.where(cls == tgt, log_p, 0.0)
    loss_sum = -jnp.sum(picked)

    # argmax over classes (ties -> smallest index), reusing the softmax max (sh == 0).
    cand = jnp.where(sh >= 0.0, cls, C)
    y_hat = jnp.min(cand, axis=0, keepdims=True)               # (1, TQ)
    correct = jnp.sum(jnp.where(y_hat == tgt, 1.0, 0.0))       # pad rows never match -1

    lane = lax.broadcasted_iota(jnp.int32, (1, 128), 1)
    out_ref[...] = jnp.where(lane == 0, loss_sum,
                             jnp.where(lane == 1, correct, 0.0))


def _proto_pallas_call(protos_in, p2, tgt_row, query_f, tq_eff, Nq):
    C, D = protos_in.shape
    nq_pad = query_f.shape[0]
    num_tiles = nq_pad // tq_eff
    part = pl.pallas_call(
        _proto_kernel,
        out_shape=jax.ShapeDtypeStruct((num_tiles, 1, 128), jnp.float32),
        grid=(num_tiles,),
        in_specs=[
            pl.BlockSpec((C, D), lambda i: (0, 0)),        # protos: resident, tiny
            pl.BlockSpec((C, 1), lambda i: (0, 0)),        # ||p||^2: resident, tiny
            pl.BlockSpec((1, tq_eff), lambda i: (0, i)),   # per-tile targets
            pl.BlockSpec((tq_eff, D), lambda i: (i, 0)),   # query tiles stream
        ],
        out_specs=pl.BlockSpec((None, 1, 128), lambda i: (i, 0, 0)),
        compiler_params=pltpu.CompilerParams(
            dimension_semantics=("parallel",),             # v7x: split tiles over 2 TCs
            vmem_limit_bytes=48 * 1024 * 1024),            # safe on v7x's 64 MiB VMEM
    )(protos_in, p2, tgt_row, query_f)
    loss = jnp.sum(part[:, 0, 0]) / jnp.float32(Nq)
    acc = jnp.sum(part[:, 0, 1]) / jnp.float32(Nq)
    return loss, acc.reshape(1)


def prototypical_loss(features, target, n_support, *, tq=512,
                      matmul_dtype=jnp.bfloat16):
    """JAX/Pallas equivalent of prototypical_loss(input, target, n_support)."""
    feats = jnp.asarray(features, jnp.float32)

    # Host-side class/index bookkeeping, mirroring the original module's .to('cpu') path.
    # TODO(synk): in a training loop this data-dependent glue forces a host sync and a
    # fresh Mosaic compile per class composition; bucket/pad to fixed (C_max*S, Q_max)
    # buffers and pass the true counts/targets via PrefetchScalarGridSpec scalars with
    # in-kernel masking so one compiled kernel serves all episodes.
    tgt_np = np.asarray(jax.device_get(target))

    classes = np.unique(tgt_np)
    nq_list, selected = [], []
    for c in classes:
        nq = int((tgt_np == c).sum()) - n_support
        if nq > 0:
            nq_list.append(nq)
            selected.append(c)
    n_query = int(min(nq_list))
    classes = [c for c in classes if c in selected]
    C = len(classes)
    S = int(n_support)
    Q = n_query
    Nq = C * Q

    support_idxs = np.concatenate(
        [np.nonzero(tgt_np == c)[0][:S] for c in classes])
    query_idxs = np.concatenate(
        [np.nonzero(tgt_np == c)[0][S:S + Q] for c in classes])

    D = int(feats.shape[1])
    stream_dtype = jnp.dtype(matmul_dtype)
    stream_bytes = stream_dtype.itemsize

    # --- query tiling: 128-aligned, VMEM-bounded, even tile count for v7x megacore ---
    n128 = _cdiv(Nq, 128)                       # query extent in 128-lane chunks
    t128 = max(1, min(max(tq, 128) // 128, n128))
    while t128 > 1 and 2 * t128 * 128 * D * stream_bytes > 24 * 1024 * 1024:
        t128 -= 1                               # keep double-buffered tile well in VMEM
    num_tiles = _cdiv(n128, t128)
    if num_tiles > 1 and num_tiles % 2 == 1:
        # prefer an even number of grid steps so both v7x TensorCores get work
        t128 = _cdiv(n128, num_tiles + 1)
        num_tiles = _cdiv(n128, t128)           # may still be odd in rare corner cases
    tq_eff = t128 * 128
    nq_pad = num_tiles * tq_eff

    # --- prototypes & ||p||^2 computed once (f32), outside the grid ---
    support_f = feats[jnp.asarray(support_idxs, jnp.int32)]       # (C*S, D) class-major
    protos_f32 = support_f.reshape(C, S, D).mean(axis=1)          # (C, D) f32
    p2 = jnp.sum(protos_f32 * protos_f32, axis=1, keepdims=True)  # (C, 1) f32
    protos_in = protos_f32.astype(stream_dtype)                   # (C, D) matmul dtype

    # --- query stream (matmul dtype, no feature-dim padding) + per-query targets ---
    query_f = feats[jnp.asarray(query_idxs, jnp.int32)].astype(stream_dtype)  # (Nq, D)
    query_f = jnp.pad(query_f, ((0, nq_pad - Nq), (0, 0)))

    tgt_row = np.full((1, nq_pad), -1, dtype=np.int32)
    tgt_row[0, :Nq] = np.repeat(np.arange(C, dtype=np.int32), Q)  # class-major layout
    tgt_row = jnp.asarray(tgt_row)

    return _proto_pallas_call(protos_in, p2, tgt_row, query_f, tq_eff, Nq)


class PrototypicalLoss:
    """Mirror of the PyTorch module: holds n_support, forward == __call__."""

    def __init__(self, n_support):
        self.n_support = n_support

    def __call__(self, features, target, **kwargs):
        return prototypical_loss(features, target, self.n_support, **kwargs)


def _numpy_reference(features, target, n_support):
    """Pure-numpy reference of the PyTorch forward, for a sanity check."""
    x = np.asarray(features, np.float32)
    t = np.asarray(target)
    classes = np.unique(t)
    nq_list, selected = [], []
    for c in classes:
        nq = int((t == c).sum()) - n_support
        if nq > 0:
            nq_list.append(nq)
            selected.append(c)
    n_query = min(nq_list)
    classes = [c for c in classes if c in selected]
    C = len(classes)
    protos = np.stack([x[np.nonzero(t == c)[0][:n_support]].mean(0) for c in classes])
    q_idx = np.concatenate(
        [np.nonzero(t == c)[0][n_support:n_support + n_query] for c in classes])
    q = x[q_idx]
    d = ((q[:, None, :] - protos[None, :, :]) ** 2).sum(-1)
    neg = -d
    neg = neg - neg.max(1, keepdims=True)
    log_p = neg - np.log(np.exp(neg).sum(1, keepdims=True))
    tgt = np.repeat(np.arange(C), n_query)
    loss = -log_p[np.arange(C * n_query), tgt].mean()
    acc = (log_p.argmax(1) == tgt).astype(np.float32).mean()
    return loss, acc


if __name__ == "__main__":
    N_SUPPORT = 2
    D = 32

    # Deterministic synthetic inputs: 3 classes with counts [6, 6, 5] -> n_query = 3.
    key = jax.random.PRNGKey(0)
    k_feat, k_perm = jax.random.split(key)
    target_base = np.array([0] * 6 + [1] * 6 + [2] * 5, dtype=np.int32)
    perm = np.asarray(jax.random.permutation(k_perm, target_base.shape[0]))
    target = jnp.asarray(target_base[perm])
    features = jax.random.normal(k_feat, (target_base.shape[0], D), dtype=jnp.float32)

    ref_loss, ref_acc = _numpy_reference(np.asarray(features), np.asarray(target), N_SUPPORT)

    loss_mod = PrototypicalLoss(N_SUPPORT)

    # f32 MXU path: tight check against the numpy reference.
    loss_f32, acc_f32 = loss_mod(features, target, matmul_dtype=jnp.float32)
    loss_f32 = jax.block_until_ready(loss_f32)
    acc_f32 = jax.block_until_ready(acc_f32)
    assert np.allclose(float(loss_f32), ref_loss, atol=1e-3), (float(loss_f32), ref_loss)
    assert np.allclose(float(acc_f32[0]), ref_acc, atol=1e-5), (float(acc_f32[0]), ref_acc)

    # bf16 stream + MXU path (production default per v5e/v6e/v7x MXU): loose numeric check.
    loss_bf, acc_bf = loss_mod(features, target)
    loss_bf = jax.block_until_ready(loss_bf)
    acc_bf = jax.block_until_ready(acc_bf)
    assert np.isfinite(float(loss_bf)) and abs(float(loss_bf) - ref_loss) < 0.5, \
        (float(loss_bf), ref_loss)
    assert acc_bf.shape == (1,) and 0.0 <= float(acc_bf[0]) <= 1.0

    print("KERNEL_OK")
</pallas_src>

<mosaic_0001>
module attributes {stable_mosaic.version = 11 : i64} {
  func.func @_proto_kernel(%arg0: i32, %arg1: memref<3x32xf32, #tpu.memory_space<vmem>>, %arg2: memref<3x1xf32, #tpu.memory_space<vmem>>, %arg3: memref<1x128xi32, #tpu.memory_space<vmem>>, %arg4: memref<128x32xf32, #tpu.memory_space<vmem>>, %arg5: memref<1x1x128xf32, #tpu.memory_space<vmem>>) attributes {dimension_semantics = [#tpu.dimension_semantics<parallel>], iteration_bounds = array<i64: 1>, scalar_prefetch = 0 : i64, scratch_operands = 0 : i64, tpu.core_type = #tpu.core_type<tc>, window_params = [{pipeline_mode = #tpu.pipeline_mode<synchronous>, transform_indices = @transform_0, window_bounds = array<i64: 3, 32>}, {pipeline_mode = #tpu.pipeline_mode<synchronous>, transform_indices = @transform_1, window_bounds = array<i64: 3, 1>}, {transform_indices = @transform_2, window_bounds = array<i64: 1, 128>}, {transform_indices = @transform_3, window_bounds = array<i64: 128, 32>}, {transform_indices = @transform_4, window_bounds = array<i64: 1, 1, 128>}]} {
    %c0 = arith.constant 0 : index
    %c0_0 = arith.constant 0 : index
    %0 = vector.load %arg4[%c0, %c0_0] : memref<128x32xf32, #tpu.memory_space<vmem>>, vector<128x32xf32>
    %c0_1 = arith.constant 0 : index
    %c0_2 = arith.constant 0 : index
    %1 = vector.load %arg1[%c0_1, %c0_2] : memref<3x32xf32, #tpu.memory_space<vmem>>, vector<3x32xf32>
    %cst = arith.constant dense<0.000000e+00> : vector<3x128xf32>
    %2 = tpu.matmul %1, %0, %cst {dimension_numbers = #tpu.dot_dimension_numbers<[1], [1], [0], [0], [0, 0, 1, 0], [], []>} : vector<3x32xf32>, vector<128x32xf32>, vector<3x128xf32> -> vector<3x128xf32>
    %cst_3 = arith.constant 2.000000e+00 : f32
    %3 = vector.broadcast %cst_3 : f32 to vector<3x128xf32>
    %4 = arith.mulf %3, %2 : vector<3x128xf32>
    %c0_4 = arith.constant 0 : index
    %c0_5 = arith.constant 0 : index
    %5 = vector.load %arg2[%c0_4, %c0_5] : memref<3x1xf32, #tpu.memory_space<vmem>>, vector<3x1xf32>
    %6 = vector.broadcast %5 : vector<3x1xf32> to vector<3x128xf32>
    %7 = arith.subf %4, %6 : vector<3x128xf32>
    %cst_6 = arith.constant dense<0xFF800000> : vector<128xf32>
    %8 = vector.multi_reduction <maximumf>, %7, %cst_6 [0] : vector<3x128xf32> to vector<128xf32>
    %9 = vector.shape_cast %8 : vector<128xf32> to vector<1x128xf32>
    %10 = vector.broadcast %9 : vector<1x128xf32> to vector<3x128xf32>
    %11 = arith.subf %7, %10 : vector<3x128xf32>
    %12 = math.exp %11 : vector<3x128xf32>
    %cst_7 = arith.constant dense<0.000000e+00> : vector<128xf32>
    %13 = vector.multi_reduction <add>, %12, %cst_7 [0] : vector<3x128xf32> to vector<128xf32>
    %14 = vector.shape_cast %13 : vector<128xf32> to vector<1x128xf32>
    %15 = math.log %14 : vector<1x128xf32>
    %16 = vector.broadcast %15 : vector<1x128xf32> to vector<3x128xf32>
    %17 = arith.subf %11, %16 : vector<3x128xf32>
    %c0_8 = arith.constant 0 : index
    %c0_9 = arith.constant 0 : index
    %18 = vector.load %arg3[%c0_8, %c0_9] : memref<1x128xi32, #tpu.memory_space<vmem>>, vector<1x128xi32>
    %19 = tpu.iota {dimensions = array<i32: 0>} : vector<3x128xi32>
    %20 = vector.broadcast %18 : vector<1x128xi32> to vector<3x128xi32>
    %21 = arith.cmpi eq, %19, %20 : vector<3x128xi32>
    %cst_10 = arith.constant 0.000000e+00 : f32
    %22 = vector.broadcast %cst_10 : f32 to vector<3x128xf32>
    %23 = arith.select %21, %17, %22 : vector<3x128xi1>, vector<3x128xf32>
    %24 = vector.shape_cast %23 : vector<3x128xf32> to vector<1x3x128xf32>
    %cst_11 = arith.constant dense<0.000000e+00> : vector<1xf32>
    %25 = vector.multi_reduction <add>, %24, %cst_11 [1, 2] : vector<1x3x128xf32> to vector<1xf32>
    %26 = vector.shape_cast %25 : vector<1xf32> to vector<1x1x1xf32>
    %27 = vector.extract %26[0, 0, 0] : f32 from vector<1x1x1xf32>
    %cst_12 = arith.constant 0.000000e+00 : f32
    %28 = arith.subf %cst_12, %27 : f32
    %cst_13 = arith.constant 0.000000e+00 : f32
    %29 = vector.broadcast %cst_13 : f32 to vector<3x128xf32>
    %30 = arith.cmpf oge, %11, %29 : vector<3x128xf32>
    %c3_i32 = arith.constant 3 : i32
    %31 = vector.broadcast %c3_i32 : i32 to vector<3x128xi32>
    %32 = arith.select %30, %19, %31 : vector<3x128xi1>, vector<3x128xi32>
    %cst_14 = arith.constant dense<2147483647> : vector<128xi32>
    %33 = vector.multi_reduction <minsi>, %32, %cst_14 [0] : vector<3x128xi32> to vector<128xi32>
    %34 = vector.shape_cast %33 : vector<128xi32> to vector<1x128xi32>
    %35 = arith.cmpi eq, %34, %18 : vector<1x128xi32>
    %cst_15 = arith.constant 1.000000e+00 : f32
    %cst_16 = arith.constant 0.000000e+00 : f32
    %36 = vector.broadcast %cst_15 : f32 to vector<1x128xf32>
    %37 = vector.broadcast %cst_16 : f32 to vector<1x128xf32>
    %38 = arith.select %35, %36, %37 : vector<1x128xi1>, vector<1x128xf32>
    %39 = vector.shape_cast %38 : vector<1x128xf32> to vector<1x1x128xf32>
    %cst_17 = arith.constant dense<0.000000e+00> : vector<1xf32>
    %40 = vector.multi_reduction <add>, %39, %cst_17 [1, 2] : vector<1x1x128xf32> to vector<1xf32>
    %41 = vector.shape_cast %40 : vector<1xf32> to vector<1x1x1xf32>
    %42 = vector.extract %41[0, 0, 0] : f32 from vector<1x1x1xf32>
    %43 = tpu.iota {dimensions = array<i32: 1>} : vector<1x128xi32>
    %c0_i32 = arith.constant 0 : i32
    %44 = vector.broadcast %c0_i32 : i32 to vector<1x128xi32>
    %45 = arith.cmpi eq, %43, %44 : vector<1x128xi32>
    %c1_i32 = arith.constant 1 : i32
    %46 = vector.broadcast %c1_i32 : i32 to vector<1x128xi32>
    %47 = arith.cmpi eq, %43, %46 : vector<1x128xi32>
    %cst_18 = arith.constant 0.000000e+00 : f32
    %48 = vector.broadcast %42 : f32 to vector<1x128xf32>
    %49 = vector.broadcast %cst_18 : f32 to vector<1x128xf32>
    %50 = arith.select %47, %48, %49 : vector<1x128xi1>, vector<1x128xf32>
    %51 = vector.broadcast %28 : f32 to vector<1x128xf32>
    %52 = arith.select %45, %51, %50 : vector<1x128xi1>, vector<1x128xf32>
    %c0_19 = arith.constant 0 : index
    %c0_20 = arith.constant 0 : index
    %c0_21 = arith.constant 0 : index
    %53 = vector.load %arg5[%c0_19, %c0_20, %c0_21] : memref<1x1x128xf32, #tpu.memory_space<vmem>>, vector<1x1x128xf32>
    %54 = vector.shape_cast %53 : vector<1x1x128xf32> to vector<1x128xf32>
    %55 = vector.shape_cast %52 : vector<1x128xf32> to vector<1x1x128xf32>
    tpu.vector_store %arg5[%c0_19, %c0_20, %c0_21], %55 {strides = array<i32>} : memref<1x1x128xf32, #tpu.memory_space<vmem>>, vector<1x1x128xf32>,
    return
  }
  func.func @transform_0(%arg0: i32) -> (i32, i32) {
    %c0_i32 = arith.constant 0 : i32
    %c0_i32_0 = arith.constant 0 : i32
    %c0_i32_1 = arith.constant 0 : i32
    return %c0_i32, %c0_i32_0 : i32, i32
  }
  func.func @transform_1(%arg0: i32) -> (i32, i32) {
    %c0_i32 = arith.constant 0 : i32
    %c0_i32_0 = arith.constant 0 : i32
    %c0_i32_1 = arith.constant 0 : i32
    return %c0_i32, %c0_i32_0 : i32, i32
  }
  func.func @transform_2(%arg0: i32) -> (i32, i32) {
    %c0_i32 = arith.constant 0 : i32
    %c0_i32_0 = arith.constant 0 : i32
    return %c0_i32, %arg0 : i32, i32
  }
  func.func @transform_3(%arg0: i32) -> (i32, i32) {
    %c0_i32 = arith.constant 0 : i32
    %c0_i32_0 = arith.constant 0 : i32
    return %arg0, %c0_i32 : i32, i32
  }
  func.func @transform_4(%arg0: i32) -> (i32, i32, i32) {
    %c0_i32 = arith.constant 0 : i32
    %c0_i32_0 = arith.constant 0 : i32
    %c0_i32_1 = arith.constant 0 : i32
    return %arg0, %c0_i32, %c0_i32_0 : i32, i32, i32
  }
}

</mosaic_0001>

<llo_original>
// kernel: tpu_custom_call.1
$region0: #{tpu_custom_call.1}
  #allocation0 [shape = 'u32[]', space=smem, size = 0x4, offset = 0x4, fixed_abs, tag = 'smem constant byte address 0x4 - core index']
  #allocation1 [shape = 'u32[144,128]{1,0:T(1,128)}', space=vmem, size = 0x12000, scoped, tag = 'internal scratch']
  %s0 = inlined_call_operand.vmem [shape: f32[3,32], index: 0, kind: input, shape index: {}]
  %s1 = inlined_call_operand.vmem [shape: f32[3,1], index: 1, kind: input, shape index: {}]
  %s2 = inlined_call_operand.vmem [shape: s32[1,128], index: 2, kind: input, shape index: {}]
  %s3 = inlined_call_operand.vmem [shape: f32[128,32], index: 3, kind: input, shape index: {}]
  %s4 = inlined_call_operand.hbm [shape: f32[1,1,128], index: 4, kind: output, shape index: {}]
  %s5 = sld [smem:[#allocation0]]
  $region26: #{tpu_custom_call.1} parent=0
    _
  %s7 = ssub.s32 1, %s5
  %s8 = scalar_select 0, %s7, %s5
  $region1: #{tpu_custom_call.1} parent=0
    #allocation2 [shape = 'u8[512]{0}', space=vmem, size = 0x400, scoped, tag = 'output window, operand 0, single buffered']
    #allocation3 [shape = 's32[1]{0}', space=sflag, size = 0x4, scoped, tag = 'scoped memory for tpu_custom_call.1']
    %9 = vsyncpa [#allocation3], 0
    // Predicated region
    $region2: #{tpu_custom_call.1} parent=1 // pred_check
      _
    $region3: #{tpu_custom_call.1} parent=1 // pred_check_branch
      %11 = sbr.rel (0) target = $region5
    $region4: #{tpu_custom_call.1} parent=1 // pred_region
      _
    $region5: #{tpu_custom_call.1} parent=1 // pred_fallthru
      _
    // Predicated region
    $region6: #{tpu_custom_call.1} parent=1 // pred_check
      _
    $region7: #{tpu_custom_call.1} parent=1 // pred_check_branch
      %13 = sbr.rel (0) target = $region9
    $region8: #{tpu_custom_call.1} parent=1 // pred_region
      _
    $region9: #{tpu_custom_call.1} parent=1 // pred_fallthru
      _
    // Predicated region
    $region10: #{tpu_custom_call.1} parent=1 // pred_check
      _
    $region11: #{tpu_custom_call.1} parent=1 // pred_check_branch
      %15 = sbr.rel (0) target = $region13
    $region12: #{tpu_custom_call.1} parent=1 // pred_region
      _
    $region13: #{tpu_custom_call.1} parent=1 // pred_fallthru
      _
    // Predicated region
    $region14: #{tpu_custom_call.1} parent=1 // pred_check
      _
    $region15: #{tpu_custom_call.1} parent=1 // pred_check_branch
      %17 = sbr.rel (0) target = $region17
    $region16: #{tpu_custom_call.1} parent=1 // pred_region
      _
    $region17: #{tpu_custom_call.1} parent=1 // pred_fallthru
      _
    %v18 = vld [vmem:[%s3] sm:$0xff]
    %v19 = vld [vmem:[%s3 + $0x8] sm:$0xff]
    %v20 = vld [vmem:[%s3 + $0x10] sm:$0xff]
    %v21 = vld [vmem:[%s3 + $0x18] sm:$0xff]
    %v22 = vld [vmem:[%s3 + $0x20] sm:$0xff]
    %v23 = vld [vmem:[%s3 + $0x28] sm:$0xff]
    %v24 = vld [vmem:[%s3 + $0x30] sm:$0xff]
    %v25 = vld [vmem:[%s3 + $0x38] sm:$0xff]
    %v26 = vld [vmem:[%s3 + $0x40] sm:$0xff]
    %v27 = vld [vmem:[%s3 + $0x48] sm:$0xff]
    %v28 = vld [vmem:[%s3 + $0x50] sm:$0xff]
    %v29 = vld [vmem:[%s3 + $0x58] sm:$0xff]
    %v30 = vld [vmem:[%s3 + $0x60] sm:$0xff]
    %v31 = vld [vmem:[%s3 + $0x68] sm:$0xff]
    %v32 = vld [vmem:[%s3 + $0x70] sm:$0xff]
    %v33 = vld [vmem:[%s3 + $0x78] sm:$0xff]
    %v34 = vld [vmem:[%s0] sm:$0x7]
    %vm35 = vcmask 261120
    %v37 = vsel %vm35, %v34, 0
    %v40 = vsel %vm35, %v18, 0
    %v43 = vsel %vm35, %v19, 0
    %v46 = vsel %vm35, %v20, 0
    %v49 = vsel %vm35, %v21, 0
    %v52 = vsel %vm35, %v22, 0
    %v55 = vsel %vm35, %v23, 0
    %v58 = vsel %vm35, %v24, 0
    %v61 = vsel %vm35, %v25, 0
    %v64 = vsel %vm35, %v26, 0
    %v67 = vsel %vm35, %v27, 0
    %v70 = vsel %vm35, %v28, 0
    %v73 = vsel %vm35, %v29, 0
    %v76 = vsel %vm35, %v30, 0
    %v79 = vsel %vm35, %v31, 0
    %v82 = vsel %vm35, %v32, 0
    %v85 = vsel %vm35, %v33, 0
    %87 = vmatprep.subr.mxu0 0.0
    %88 = vmatpush1.xpose.msra.mxu0 %v40
    %89 = vmatprep.subr.mxu0 0.0
    %90 = vmatpush1.xpose.msra.mxu0 %v43
    %91 = vmatprep.subr.mxu0 0.0
    %92 = vmatpush1.xpose.msra.mxu0 %v46
    %93 = vmatprep.subr.mxu0 0.0
    %94 = vmatpush1.xpose.msra.mxu0 %v49
    %95 = vmatprep.subr.mxu0 0.0
    %96 = vmatpush1.xpose.msra.mxu0 %v52
    %97 = vmatprep.subr.mxu0 0.0
    %98 = vmatpush1.xpose.msra.mxu0 %v55
    %99 = vmatprep.subr.mxu0 0.0
    %100 = vmatpush1.xpose.msra.mxu0 %v58
    %101 = vmatprep.subr.mxu0 0.0
    %102 = vmatpush1.xpose.msra.mxu0 %v61
    %103 = vmatprep.subr.mxu0 0.0
    %104 = vmatpush1.xpose.msra.mxu0 %v64
    %105 = vmatprep.subr.mxu0 0.0
    %106 = vmatpush1.xpose.msra.mxu0 %v67
    %107 = vmatprep.subr.mxu0 0.0
    %108 = vmatpush1.xpose.msra.mxu0 %v70
    %109 = vmatprep.subr.mxu0 0.0
    %110 = vmatpush1.xpose.msra.mxu0 %v73
    %111 = vmatprep.subr.mxu0 0.0
    %112 = vmatpush1.xpose.msra.mxu0 %v76
    %113 = vmatprep.subr.mxu0 0.0
    %114 = vmatpush1.xpose.msra.mxu0 %v79
    %115 = vmatprep.subr.mxu0 0.0
    %116 = vmatpush1.xpose.msra.mxu0 %v82
    %117 = vmatprep.subr.mxu0 0.0
    %118 = vmatpush1.xpose.msra.mxu0 %v85
    %119 = vmatprep.subr.mxu0 0.0
    %120 = vmatpush1.xpose.msra.mxu0 0.0
    %121 = vmatprep.subr.mxu0 0.0
    %122 = vmatpush1.xpose.msra.mxu0 0.0
    %123 = vmatprep.subr.mxu0 0.0
    %124 = vmatpush1.xpose.msra.mxu0 0.0
    %125 = vmatprep.subr.mxu0 0.0
    %126 = vmatpush1.xpose.msra.mxu0 0.0
    %127 = vmatprep.subr.mxu0 0.0
    %128 = vmatpush1.xpose.msra.mxu0 0.0
    %129 = vmatprep.subr.mxu0 0.0
    %130 = vmatpush1.xpose.msra.mxu0 0.0
    %131 = vmatprep.subr.mxu0 0.0
    %132 = vmatpush1.xpose.msra.mxu0 0.0
    %133 = vmatprep.subr.mxu0 0.0
    %134 = vmatpush1.xpose.msra.mxu0 0.0
    %135 = vmatprep.subr.mxu0 0.0
    %136 = vmatpush1.xpose.msra.mxu0 0.0
    %137 = vmatprep.subr.mxu0 0.0
    %138 = vmatpush1.xpose.msra.mxu0 0.0
    %139 = vmatprep.subr.mxu0 0.0
    %140 = vmatpush1.xpose.msra.mxu0 0.0
    %141 = vmatprep.subr.mxu0 0.0
    %142 = vmatpush1.xpose.msra.mxu0 0.0
    %143 = vmatprep.subr.mxu0 0.0
    %144 = vmatpush1.xpose.msra.mxu0 0.0
    %145 = vmatprep.subr.mxu0 0.0
    %146 = vmatpush1.xpose.msra.mxu0 0.0
    %147 = vmatprep.subr.mxu0 0.0
    %148 = vmatpush1.xpose.msra.mxu0 0.0
    %149 = vmatprep.subr.mxu0 0.0
    %150 = vmatpush1.xpose.msra.mxu0 0.0
    %151 = vmatprep.mubr.f32.mxu0 0.0
    %152 = vmatmul.mubr.f32.gmra.mrb[0].mxu0 %v37
    %v153 = vpop.f32.mrb[0].mxu0
    %v154 = vadd.f32 0.0, %v153
    %v155 = vpop.f32.mrb[0].mxu0
    %156 = vdwg.mxu0
    %v157 = vmul.f32 %v154, 2.0
    %v158 = vld [vmem:[%s1] sm:$0x7]
    %160 = vset.pattern.permute.xlu0 0
    %161 = vperm.xlu0 %160, %v158
    %v162 = vpop.permute.xlu0 %161
    %v164 = vsub.f32 %v157, %v162
    %vm165 = vcmask 1042432
    %v166 = vsel %vm165, %v164, -inf
    %v167 = vrot.slane %v166, 4
    %v168 = vmax.f32 %v166, %v167
    %v169 = vrot.slane %v168, 2
    %v170 = vmax.f32 %v168, %v169
    %v171 = vrot.slane %v170, 1
    %v172 = vmax.f32 %v170, %v171
    %v173 = vsub.f32 %v164, %v172
    %v174 = vmul.f32 %v173, 1.442695
    %v175 = vpow.pop %v174
    %v176 = vsel %vm165, %v175, 0.0
    %v177 = vrot.slane %v176, 4
    %v178 = vadd.f32 %v176, %v177
    %v179 = vrot.slane %v178, 2
    %v180 = vadd.f32 %v178, %v179
    %v181 = vrot.slane %v180, 1
    %v182 = vadd.f32 %v180, %v181
    %v183 = vlog2.pop %v182
    %v184 = vmul.f32 %v183, 0.6931472
    %v185 = vsub.f32 %v173, %v184
    %v186 = vld [vmem:[%s2] sm:$0x1]
    %v187 = vlaneseq
    %v188 = vshrl.u32 %v187, 7
    %v189 = vlaneseq
    %v190 = vshrl.u32 %v189, 7
    %v191 = vsub.s32 0, %v190
    %v192 = vrot.slane %v186, %v191
    %vm193 = vcmp.eq.s32.totalorder %v188, %v192
    %v194 = vsel %vm193, %v185, 0.0
    %v195 = vsel %vm165, %v194, 0.0
    %196 = vadd.xlane.f32.xlu0 %v195
    %v197 = vpop.xlane.xlu0 %196
    %v198 = vrot.slane %v197, 4
    %v199 = vadd.f32 %v197, %v198
    %v200 = vrot.slane %v199, 2
    %v201 = vadd.f32 %v199, %v200
    %v202 = vrot.slane %v201, 1
    %v203 = vadd.f32 %v201, %v202
    %s204 = vtos %v203
    %s205 = ssub.f32 0.0, %s204
    %vm206 = vcmp.ge.f32.partialorder %v173, 0.0
    %v207 = vsel %vm206, %v188, 3
    %v208 = vsel %vm165, %v207, 2147483647
    %v209 = vrot.slane %v208, 4
    %vm210 = vcmp.lt.s32.totalorder %v208, %v209
    %v211 = vsel %vm210, %v208, %v209
    %v212 = vrot.slane %v211, 2
    %vm213 = vcmp.lt.s32.totalorder %v211, %v212
    %v214 = vsel %vm213, %v211, %v212
    %v215 = vrot.slane %v214, 1
    %vm216 = vcmp.lt.s32.totalorder %v214, %v215
    %v217 = vsel %vm216, %v214, %v215
    %vm218 = vcmp.eq.s32.totalorder %v217, %v186
    %v219 = vsel %vm218, 1.0, 0.0
    %vm220 = vcmask 1040384
    %v221 = vsel %vm220, %v219, 0.0
    %222 = vadd.xlane.f32.xlu0 %v221
    %v223 = vpop.xlane.xlu0 %222
    %v224 = vrot.slane %v223, 4
    %v225 = vadd.f32 %v223, %v224
    %v226 = vrot.slane %v225, 2
    %v227 = vadd.f32 %v225, %v226
    %v228 = vrot.slane %v227, 1
    %v229 = vadd.f32 %v227, %v228
    %s230 = vtos %v229
    %v231 = vlaneseq
    %v232 = vand.u32 %v231, 127
    %vm233 = vcmp.eq.s32.totalorder %v232, 0
    %vm234 = vcmp.eq.s32.totalorder %v232, 1
    %v235 = vstv %s230
    %v236 = vsel %vm234, %v235, 0.0
    %v237 = vstv %s205
    %v238 = vsel %vm233, %v237, %v236
    %239 = vst [vmem:[#allocation2] sm:$0x1] %v238
    // Predicated region
    $region18: #{tpu_custom_call.1} parent=1 // pred_check
      _
    $region19: #{tpu_custom_call.1} parent=1 // pred_check_branch
      %241 = sbr.rel (0) target = $region21
    $region20: #{tpu_custom_call.1} parent=1 // pred_region
      %s243 = ssub.s32 16, 16
      %244 = vsyncadd [#allocation3], %s243
      %s246 = sshll.u32 [#allocation2], 4
      %s247 = int_to_ptr.vmem [resolvable:$true] %s246
      %249 = dma.vmem_to_hbm [thread:$0]  %s247, 16, %s4, [#allocation3]
    $region21: #{tpu_custom_call.1} parent=1 // pred_fallthru
      _
    // Predicated region
    $region22: #{tpu_custom_call.1} parent=1 // pred_check
      _
    $region23: #{tpu_custom_call.1} parent=1 // pred_check_branch
      %251 = sbr.rel (0) target = $region25
    $region24: #{tpu_custom_call.1} parent=1 // pred_region
      %252 = dma.done [#allocation3], 16
    $region25: #{tpu_custom_call.1} parent=1 // pred_fallthru
      _
    %253 = vsyncpa [#allocation3], 1

</llo_original>
